<compile_context>
chip_gen: v5e
topology: v5e:2x2
jax: 0.10.0
libtpu: 0.0.40
codegen_flags: <defaults>
</compile_context>

<pallas_src>
import functools

import jax
import jax.numpy as jnp
from jax.experimental import pallas as pl
from jax.experimental.pallas import tpu as pltpu


def _expr_autodisc_kernel(xc_ref, w1_ref, b1_ref, w2t_ref, b2_ref, bin_emb_ref, *rest,
                          has_masks, fast):
    # xc_ref:      (TM, 1|2)     [:, 0] = expression scalar, [:, 1] = code (0 normal/1 pad/2 mask)
    # w1_ref/b1:   (1, BINP)     layer1 (Linear(1, bin)) weight (squeezed) / bias, bin-padded
    # w2t_ref:     (BINP, BINP)  W2^T + bin_alpha*I (folded in wrapper), bin-padded
    # b2_ref:      (1, BINP)     layer2 bias; padded bins hold -1e30 so softmax -> exactly 0
    # bin_emb_ref: (BINP, DP)    embedding table T (rows for padded bins are zero)
    # tok_emb_ref: (2, DP)       row 0 = pad token emb, row 1 = mask token emb (only if has_masks)
    # o_ref:       (TM, DP)
    if has_masks:
        tok_emb_ref, o_ref = rest
    else:
        (o_ref,) = rest

    xc = xc_ref[...]
    x = xc[:, 0:1]                                                   # (TM, 1)

    v1 = x * w1_ref[...] + b1_ref[...]                               # (TM, BINP) Linear(1, bin)
    v2 = jnp.maximum(v1, 0.1 * v1)                                   # LeakyReLU(0.1), slope < 1
    # bin_alpha already folded into w2t (= W2^T + alpha*I) -> single MXU matmul for the projection
    v3 = jnp.dot(v2.astype(w2t_ref.dtype), w2t_ref[...],
                 preferred_element_type=jnp.float32) + b2_ref[...]   # (TM, BINP)

    m = jnp.max(v3, axis=-1, keepdims=True)                          # keep softmax math in f32
    p = jnp.exp(v3 - m)
    s = jnp.sum(p, axis=-1, keepdims=True)

    if fast:
        # defer normalization past the embedding matmul: no w4 intermediate, EUP reciprocal
        e = jnp.dot(p.astype(bin_emb_ref.dtype), bin_emb_ref[...],
                    preferred_element_type=jnp.float32)              # (TM, DP)
        e = e * pl.reciprocal(s, approx=True)
    else:
        # exact / verification path: identical op order to the PyTorch forward
        w4 = p / s
        e = jnp.dot(w4.astype(bin_emb_ref.dtype), bin_emb_ref[...],
                    preferred_element_type=jnp.float32)

    if has_masks:
        code = xc[:, 1:2]
        # pad applied first, mask overrides (code==2 wins) -> same semantics as the PyTorch forward
        e = jnp.where(code > 0.5, tok_emb_ref[0:1, :], e)
        e = jnp.where(code > 1.5, tok_emb_ref[1:2, :], e)
    o_ref[...] = e.astype(o_ref.dtype)


def _pick_tiling(n_rows):
    """Row-tile size and VMEM limit keyed on N and (best effort) on the local TPU generation."""
    tm_cap = 4096
    vmem_limit = 48 << 20                         # safe inside v7x's 64 MiB physical VMEM
    try:
        info = pltpu.get_tpu_info()
        if info.vmem_capacity_bytes >= (96 << 20):   # v5e / v6e: 128 MiB physical VMEM
            vmem_limit = 64 << 20
    except Exception:
        pass                                       # conservative defaults work on all generations
    tm = max(8, min(tm_cap, pl.next_power_of_2(max(int(n_rows), 1))))
    return tm, vmem_limit


def expression_auto_discretization(gene_expression, params, pad_mask=None, masked_mask=None,
                                   *, bin_alpha=1.0, tm=None, use_bf16=True, out_dtype=None,
                                   vmem_limit_bytes=None, return_padded=False):
    B, S = gene_expression.shape
    N = B * S
    bin_num = params["w1"].shape[0]
    d_model = params["emb"].shape[1]

    if out_dtype is None:
        out_dtype = jnp.bfloat16 if use_bf16 else jnp.float32
    mm_dtype = jnp.bfloat16 if use_bf16 else jnp.float32

    auto_tm, auto_vmem = _pick_tiling(N)
    if tm is None:
        tm = auto_tm
    if vmem_limit_bytes is None:
        vmem_limit_bytes = auto_vmem

    # --- padded sizes: rows -> multiple of tm; bins and d_model -> multiples of 128 (lane-dense)
    n_pad = (-N) % tm
    Np = N + n_pad
    BINP = ((bin_num + 127) // 128) * 128
    DP = ((d_model + 127) // 128) * 128

    has_masks = (pad_mask is not None) or (masked_mask is not None)

    # --- per-row side input: expression scalar (+ packed pad/mask code only when needed)
    x = gene_expression.reshape(N).astype(jnp.float32)
    if has_masks:
        pad = (jnp.zeros((N,), jnp.float32) if pad_mask is None
               else (pad_mask.reshape(N) > 0).astype(jnp.float32))
        msk = (jnp.zeros((N,), jnp.float32) if masked_mask is None
               else (masked_mask.reshape(N) > 0).astype(jnp.float32))
        code = jnp.where(msk > 0, 2.0, jnp.where(pad > 0, 1.0, 0.0))
        xc = jnp.stack([x, code], axis=-1)                               # (N, 2)
    else:
        xc = x[:, None]                                                  # (N, 1)
    xc = jnp.pad(xc, ((0, n_pad), (0, 0)))
    xc_cols = xc.shape[1]

    # --- parameters (bin-padded; padded bins -> -1e30 bias => zero softmax weight, zero emb rows)
    w1 = jnp.pad(params["w1"].reshape(1, bin_num).astype(jnp.float32),
                 ((0, 0), (0, BINP - bin_num)))
    b1 = jnp.pad(params["b1"].reshape(1, bin_num).astype(jnp.float32),
                 ((0, 0), (0, BINP - bin_num)))
    # bin_alpha folded into the projection: v3 = v2 @ (W2^T + alpha*I) + b2   (fold done in f32)
    w2t_f = params["w2"].T.astype(jnp.float32) + bin_alpha * jnp.eye(bin_num, dtype=jnp.float32)
    w2t = jnp.pad(w2t_f, ((0, BINP - bin_num), (0, BINP - bin_num))).astype(mm_dtype)
    b2 = jnp.pad(params["b2"].reshape(1, bin_num).astype(jnp.float32),
                 ((0, 0), (0, BINP - bin_num)), constant_values=-1e30)
    bin_emb = jnp.pad(params["emb"].astype(jnp.float32),
                      ((0, BINP - bin_num), (0, DP - d_model))).astype(mm_dtype)

    args = [xc, w1, b1, w2t, b2, bin_emb]
    # whole-array, resident-in-VMEM parameters: never re-DMA'd, never double-buffered
    param_spec = pl.BlockSpec(memory_space=pltpu.MemorySpace.VMEM)
    in_specs = [pl.BlockSpec((tm, xc_cols), lambda i: (i, 0)),
                param_spec, param_spec, param_spec, param_spec, param_spec]

    if has_masks:
        # mixed_precision=True path: token embeddings routed through bfloat16 (as in PyTorch)
        # TODO(synk): mixed_precision=False casts the token embeddings to torch.long; not implemented.
        pad_emb = params["emb_pad"].astype(jnp.bfloat16).astype(jnp.float32).reshape(1, d_model)
        mask_emb = params["emb_mask"].astype(jnp.bfloat16).astype(jnp.float32).reshape(1, d_model)
        tok_emb = jnp.pad(jnp.concatenate([pad_emb, mask_emb], axis=0),
                          ((0, 0), (0, DP - d_model)))                   # (2, DP)
        args.append(tok_emb)
        in_specs.append(param_spec)

    out_itemsize = 2 if out_dtype == jnp.bfloat16 else 4
    bytes_in = xc.size * 4 + sum(int(a.size) * a.dtype.itemsize for a in args[1:])
    cost = pl.CostEstimate(
        flops=2 * Np * BINP * (BINP + DP) + 8 * Np * BINP,
        transcendentals=Np * BINP,
        bytes_accessed=bytes_in + Np * DP * out_itemsize)

    out = pl.pallas_call(
        functools.partial(_expr_autodisc_kernel, has_masks=has_masks, fast=use_bf16),
        out_shape=jax.ShapeDtypeStruct((Np, DP), out_dtype),
        grid_spec=pltpu.PrefetchScalarGridSpec(
            num_scalar_prefetch=0,
            grid=(Np // tm,),
            in_specs=in_specs,
            out_specs=pl.BlockSpec((tm, DP), lambda i: (i, 0)),
        ),
        compiler_params=pltpu.CompilerParams(
            dimension_semantics=("parallel",),         # v7x: shard the row grid across 2 TCs
            vmem_limit_bytes=vmem_limit_bytes),
        cost_estimate=cost,
    )(*args)

    if return_padded:
        # production path: keep the lane-padded (.., DP) layout flowing to the consumer and avoid
        # an extra full-size read+write of the (writeback-bound) output just to strip padding.
        return out[:N].reshape(B, S, DP)
    return out[:N, :d_model].reshape(B, S, d_model)


def _reference(gene_expression, params, pad_mask=None, masked_mask=None, bin_alpha=1.0):
    # pure-JAX f32 reference of the PyTorch forward (mixed_precision=True path)
    x = gene_expression[..., None].astype(jnp.float32)                  # (B, S, 1)
    v1 = x @ params["w1"].T + params["b1"]                              # Linear(1, bin)
    v2 = jnp.where(v1 >= 0, v1, 0.1 * v1)
    v3 = bin_alpha * v2 + v2 @ params["w2"].T + params["b2"]
    w4 = jax.nn.softmax(v3, axis=-1)
    e = w4 @ params["emb"]
    if pad_mask is not None:
        pad_emb = params["emb_pad"].astype(jnp.bfloat16).astype(jnp.float32)[0]
        e = jnp.where(pad_mask[..., None] > 0, pad_emb, e)
    if masked_mask is not None:
        mask_emb = params["emb_mask"].astype(jnp.bfloat16).astype(jnp.float32)[0]
        e = jnp.where(masked_mask[..., None] > 0, mask_emb, e)
    return e


if __name__ == "__main__":
    B, S = 2, 37           # batch, sequence (nonzero-gene) length — deliberately not a tile multiple
    bin_num = 100          # scFoundation default bin count (padded to 128 in-kernel)
    d_model = 96           # deliberately not a multiple of 128 (padded to 128 in-kernel)
    bin_alpha = 1.0

    key = jax.random.PRNGKey(0)
    ks = jax.random.split(key, 8)
    params = {
        "w1": jax.random.normal(ks[0], (bin_num, 1), jnp.float32) * 0.1,        # layer1.weight
        "b1": jax.random.normal(ks[1], (bin_num,), jnp.float32) * 0.1,          # layer1.bias
        "w2": jax.random.normal(ks[2], (bin_num, bin_num), jnp.float32) * 0.1,  # layer2.weight
        "b2": jax.random.normal(ks[3], (bin_num,), jnp.float32) * 0.1,          # layer2.bias
        "emb": jax.random.normal(ks[4], (bin_num, d_model), jnp.float32),       # emb.weight
        "emb_pad": jax.random.normal(ks[5], (1, d_model), jnp.float32),         # emb_pad.weight
        "emb_mask": jax.random.normal(ks[6], (1, d_model), jnp.float32),        # emb_mask.weight
    }

    gene_expression = jax.random.uniform(ks[7], (B, S), jnp.float32, 0.0, 5.0)
    pad_mask = jnp.zeros((B, S), jnp.int32).at[:, -3:].set(1)       # last 3 positions padded
    masked_mask = jnp.zeros((B, S), jnp.int32).at[:, 0].set(1)      # first position masked

    ref = _reference(gene_expression, params, pad_mask, masked_mask, bin_alpha)

    # 1) exact f32 path, deliberately tiny tm -> multi-step grid exercised; must match tightly
    out_f32 = expression_auto_discretization(
        gene_expression, params, pad_mask, masked_mask,
        bin_alpha=bin_alpha, tm=32, use_bf16=False, out_dtype=jnp.float32)
    out_f32 = jax.block_until_ready(out_f32)
    assert out_f32.shape == (B, S, d_model)
    assert jnp.allclose(out_f32, ref, atol=1e-5, rtol=1e-5)

    # 2) fast path (auto tm / vmem limit, bf16 matmul operands, deferred softmax norm, bf16 output)
    out_fast = expression_auto_discretization(
        gene_expression, params, pad_mask, masked_mask, bin_alpha=bin_alpha)
    out_fast = jax.block_until_ready(out_fast)
    assert out_fast.shape == (B, S, d_model)
    assert out_fast.dtype == jnp.bfloat16
    assert jnp.allclose(out_fast.astype(jnp.float32), ref, atol=1e-1, rtol=1e-1)

    # 3) no-mask fast variant (code channel and the two (TM,DP) selects compiled out)
    ref_nm = _reference(gene_expression, params, None, None, bin_alpha)
    out_nm = expression_auto_discretization(gene_expression, params, bin_alpha=bin_alpha)
    out_nm = jax.block_until_ready(out_nm)
    assert out_nm.shape == (B, S, d_model)
    assert jnp.allclose(out_nm.astype(jnp.float32), ref_nm, atol=1e-1, rtol=1e-1)

    print("KERNEL_OK")
</pallas_src>

<mosaic_0001>
module attributes {stable_mosaic.version = 11 : i64} {
  func.func @_expr_autodisc_kernel(%arg0: i32, %arg1: memref<32x2xf32, #tpu.memory_space<vmem>>, %arg2: memref<1x128xf32, #tpu.memory_space<vmem>>, %arg3: memref<1x128xf32, #tpu.memory_space<vmem>>, %arg4: memref<128x128xf32, #tpu.memory_space<vmem>>, %arg5: memref<1x128xf32, #tpu.memory_space<vmem>>, %arg6: memref<128x128xf32, #tpu.memory_space<vmem>>, %arg7: memref<2x128xf32, #tpu.memory_space<vmem>>, %arg8: memref<32x128xf32, #tpu.memory_space<vmem>>) attributes {dimension_semantics = [#tpu.dimension_semantics<parallel>], iteration_bounds = array<i64: 3>, scalar_prefetch = 0 : i64, scratch_operands = 0 : i64, tpu.core_type = #tpu.core_type<tc>, window_params = [{transform_indices = @transform_0, window_bounds = array<i64: 32, 2>}, {pipeline_mode = #tpu.pipeline_mode<synchronous>, transform_indices = @transform_1, window_bounds = array<i64: 1, 128>}, {pipeline_mode = #tpu.pipeline_mode<synchronous>, transform_indices = @transform_2, window_bounds = array<i64: 1, 128>}, {pipeline_mode = #tpu.pipeline_mode<synchronous>, transform_indices = @transform_3, window_bounds = array<i64: 128, 128>}, {pipeline_mode = #tpu.pipeline_mode<synchronous>, transform_indices = @transform_4, window_bounds = array<i64: 1, 128>}, {pipeline_mode = #tpu.pipeline_mode<synchronous>, transform_indices = @transform_5, window_bounds = array<i64: 128, 128>}, {pipeline_mode = #tpu.pipeline_mode<synchronous>, transform_indices = @transform_6, window_bounds = array<i64: 2, 128>}, {transform_indices = @transform_7, window_bounds = array<i64: 32, 128>}]} {
    %c0 = arith.constant 0 : index
    %c0_0 = arith.constant 0 : index
    %0 = vector.load %arg1[%c0, %c0_0] : memref<32x2xf32, #tpu.memory_space<vmem>>, vector<32x2xf32>
    %1 = vector.extract_strided_slice %0 {offsets = [0, 0], sizes = [32, 1], strides = [1, 1]} : vector<32x2xf32> to vector<32x1xf32>
    %c0_1 = arith.constant 0 : index
    %c0_2 = arith.constant 0 : index
    %2 = vector.load %arg2[%c0_1, %c0_2] : memref<1x128xf32, #tpu.memory_space<vmem>>, vector<1x128xf32>
    %3 = vector.broadcast %1 : vector<32x1xf32> to vector<32x128xf32>
    %4 = vector.broadcast %2 : vector<1x128xf32> to vector<32x128xf32>
    %5 = arith.mulf %3, %4 : vector<32x128xf32>
    %c0_3 = arith.constant 0 : index
    %c0_4 = arith.constant 0 : index
    %6 = vector.load %arg3[%c0_3, %c0_4] : memref<1x128xf32, #tpu.memory_space<vmem>>, vector<1x128xf32>
    %7 = vector.broadcast %6 : vector<1x128xf32> to vector<32x128xf32>
    %8 = arith.addf %5, %7 : vector<32x128xf32>
    %cst = arith.constant 1.000000e-01 : f32
    %9 = vector.broadcast %cst : f32 to vector<32x128xf32>
    %10 = arith.mulf %9, %8 : vector<32x128xf32>
    %11 = arith.maximumf %8, %10 : vector<32x128xf32>
    %c0_5 = arith.constant 0 : index
    %c0_6 = arith.constant 0 : index
    %12 = vector.load %arg4[%c0_5, %c0_6] : memref<128x128xf32, #tpu.memory_space<vmem>>, vector<128x128xf32>
    %cst_7 = arith.constant dense<0.000000e+00> : vector<32x128xf32>
    %13 = tpu.matmul %11, %12, %cst_7 {dimension_numbers = #tpu.dot_dimension_numbers<[1], [0], [0], [1], [0, 0, 1, 1], [], []>} : vector<32x128xf32>, vector<128x128xf32>, vector<32x128xf32> -> vector<32x128xf32>
    %c0_8 = arith.constant 0 : index
    %c0_9 = arith.constant 0 : index
    %14 = vector.load %arg5[%c0_8, %c0_9] : memref<1x128xf32, #tpu.memory_space<vmem>>, vector<1x128xf32>
    %15 = vector.broadcast %14 : vector<1x128xf32> to vector<32x128xf32>
    %16 = arith.addf %13, %15 : vector<32x128xf32>
    %cst_10 = arith.constant dense<0xFF800000> : vector<32xf32>
    %17 = vector.multi_reduction <maximumf>, %16, %cst_10 [1] : vector<32x128xf32> to vector<32xf32>
    %18 = vector.shape_cast %17 : vector<32xf32> to vector<32x1xf32>
    %19 = vector.broadcast %18 : vector<32x1xf32> to vector<32x128xf32>
    %20 = arith.subf %16, %19 : vector<32x128xf32>
    %21 = math.exp %20 : vector<32x128xf32>
    %cst_11 = arith.constant dense<0.000000e+00> : vector<32xf32>
    %22 = vector.multi_reduction <add>, %21, %cst_11 [1] : vector<32x128xf32> to vector<32xf32>
    %23 = vector.shape_cast %22 : vector<32xf32> to vector<32x1xf32>
    %24 = vector.broadcast %23 : vector<32x1xf32> to vector<32x128xf32>
    %25 = arith.divf %21, %24 : vector<32x128xf32>
    %c0_12 = arith.constant 0 : index
    %c0_13 = arith.constant 0 : index
    %26 = vector.load %arg6[%c0_12, %c0_13] : memref<128x128xf32, #tpu.memory_space<vmem>>, vector<128x128xf32>
    %cst_14 = arith.constant dense<0.000000e+00> : vector<32x128xf32>
    %27 = tpu.matmul %25, %26, %cst_14 {dimension_numbers = #tpu.dot_dimension_numbers<[1], [0], [0], [1], [0, 0, 1, 1], [], []>} : vector<32x128xf32>, vector<128x128xf32>, vector<32x128xf32> -> vector<32x128xf32>
    %28 = vector.extract_strided_slice %0 {offsets = [0, 1], sizes = [32, 1], strides = [1, 1]} : vector<32x2xf32> to vector<32x1xf32>
    %cst_15 = arith.constant 5.000000e-01 : f32
    %29 = vector.broadcast %cst_15 : f32 to vector<32x1xf32>
    %30 = arith.cmpf ogt, %28, %29 : vector<32x1xf32>
    %c0_16 = arith.constant 0 : index
    %c0_17 = arith.constant 0 : index
    %31 = vector.load %arg7[%c0_16, %c0_17] : memref<2x128xf32, #tpu.memory_space<vmem>>, vector<1x128xf32>
    %32 = vector.shape_cast %30 : vector<32x1xi1> to vector<32x1xi1>
    %33 = vector.broadcast %32 : vector<32x1xi1> to vector<32x128xi1>
    %34 = vector.shape_cast %31 : vector<1x128xf32> to vector<1x128xf32>
    %35 = vector.broadcast %34 : vector<1x128xf32> to vector<32x128xf32>
    %36 = arith.select %33, %35, %27 : vector<32x128xi1>, vector<32x128xf32>
    %cst_18 = arith.constant 1.500000e+00 : f32
    %37 = vector.broadcast %cst_18 : f32 to vector<32x1xf32>
    %38 = arith.cmpf ogt, %28, %37 : vector<32x1xf32>
    %c1 = arith.constant 1 : index
    %c0_19 = arith.constant 0 : index
    %39 = vector.load %arg7[%c1, %c0_19] : memref<2x128xf32, #tpu.memory_space<vmem>>, vector<1x128xf32>
    %40 = vector.shape_cast %38 : vector<32x1xi1> to vector<32x1xi1>
    %41 = vector.broadcast %40 : vector<32x1xi1> to vector<32x128xi1>
    %42 = vector.shape_cast %39 : vector<1x128xf32> to vector<1x128xf32>
    %43 = vector.broadcast %42 : vector<1x128xf32> to vector<32x128xf32>
    %44 = arith.select %41, %43, %36 : vector<32x128xi1>, vector<32x128xf32>
    %c0_20 = arith.constant 0 : index
    %c0_21 = arith.constant 0 : index
    %45 = vector.load %arg8[%c0_20, %c0_21] : memref<32x128xf32, #tpu.memory_space<vmem>>, vector<32x128xf32>
    tpu.vector_store %arg8[%c0_20, %c0_21], %44 {strides = array<i32>} : memref<32x128xf32, #tpu.memory_space<vmem>>, vector<32x128xf32>,
    return
  }
  func.func @transform_0(%arg0: i32) -> (i32, i32) {
    %c0_i32 = arith.constant 0 : i32
    %c0_i32_0 = arith.constant 0 : i32
    return %arg0, %c0_i32 : i32, i32
  }
  func.func @transform_1(%arg0: i32) -> (i32, i32) {
    %c0_i32 = arith.constant 0 : i32
    %c0_i32_0 = arith.constant 0 : i32
    %c0_i32_1 = arith.constant 0 : i32
    return %c0_i32, %c0_i32_0 : i32, i32
  }
  func.func @transform_2(%arg0: i32) -> (i32, i32) {
    %c0_i32 = arith.constant 0 : i32
    %c0_i32_0 = arith.constant 0 : i32
    %c0_i32_1 = arith.constant 0 : i32
    return %c0_i32, %c0_i32_0 : i32, i32
  }
  func.func @transform_3(%arg0: i32) -> (i32, i32) {
    %c0_i32 = arith.constant 0 : i32
    %c0_i32_0 = arith.constant 0 : i32
    %c0_i32_1 = arith.constant 0 : i32
    return %c0_i32, %c0_i32_0 : i32, i32
  }
  func.func @transform_4(%arg0: i32) -> (i32, i32) {
    %c0_i32 = arith.constant 0 : i32
    %c0_i32_0 = arith.constant 0 : i32
    %c0_i32_1 = arith.constant 0 : i32
    return %c0_i32, %c0_i32_0 : i32, i32
  }
  func.func @transform_5(%arg0: i32) -> (i32, i32) {
    %c0_i32 = arith.constant 0 : i32
    %c0_i32_0 = arith.constant 0 : i32
    %c0_i32_1 = arith.constant 0 : i32
    return %c0_i32, %c0_i32_0 : i32, i32
  }
  func.func @transform_6(%arg0: i32) -> (i32, i32) {
    %c0_i32 = arith.constant 0 : i32
    %c0_i32_0 = arith.constant 0 : i32
    %c0_i32_1 = arith.constant 0 : i32
    return %c0_i32, %c0_i32_0 : i32, i32
  }
  func.func @transform_7(%arg0: i32) -> (i32, i32) {
    %c0_i32 = arith.constant 0 : i32
    %c0_i32_0 = arith.constant 0 : i32
    return %arg0, %c0_i32 : i32, i32
  }
}

</mosaic_0001>

<llo_original>
// kernel: tpu_custom_call.1
$region0: #{tpu_custom_call.1}
  #allocation0 [shape = 'u32[]', space=smem, size = 0x4, offset = 0x4, fixed_abs, tag = 'smem constant byte address 0x4 - core index']
  #allocation1 [shape = 'u32[72,128]{1,0:T(1,128)}', space=vmem, size = 0x9000, scoped, tag = 'internal scratch']
  %s0 = inlined_call_operand.vmem [shape: f32[96,2], index: 0, kind: input, shape index: {}]
  %s1 = inlined_call_operand.vmem [shape: f32[1,128], index: 1, kind: input, shape index: {}]
  %s2 = inlined_call_operand.vmem [shape: f32[1,128], index: 2, kind: input, shape index: {}]
  %s3 = inlined_call_operand.hbm [shape: f32[128,128], index: 3, kind: input, shape index: {}]
  %s4 = inlined_call_operand.vmem [shape: f32[1,128], index: 4, kind: input, shape index: {}]
  %s5 = inlined_call_operand.hbm [shape: f32[128,128], index: 5, kind: input, shape index: {}]
  %s6 = inlined_call_operand.vmem [shape: f32[2,128], index: 6, kind: input, shape index: {}]
  %s7 = inlined_call_operand.hbm [shape: f32[96,128], index: 7, kind: output, shape index: {}]
  %s8 = sld [smem:[#allocation0]]
  $region69: #{tpu_custom_call.1} parent=0
    _
  %s10 = ssub.s32 1, %s8
  %s11 = scalar_select 0, %s10, %s8
  $region1: #{tpu_custom_call.1} parent=0
    #allocation2 [shape = 'u8[65536]{0}', space=vmem, size = 0x10000, scoped, tag = 'input window, operand 3, single buffered']
    #allocation3 [shape = 's32[2]{0}', space=sflag, size = 0x8, scoped, tag = 'scoped memory for tpu_custom_call.1']
    #allocation4 [shape = 's32[2]{0}', space=sflag, size = 0x8, scoped, tag = 'scoped memory for tpu_custom_call.1']
    #allocation5 [shape = 'u8[65536]{0}', space=vmem, size = 0x10000, scoped, tag = 'input window, operand 5, single buffered']
    #allocation6 [shape = 's32[1]{0}', space=sflag, size = 0x4, scoped, tag = 'scoped memory for tpu_custom_call.1']
    #allocation7 [shape = 'u8[32768]{0}', space=vmem, size = 0x8000, scoped, tag = 'output window, operand 0']
    %12 = vsyncpa [#allocation3], 0
    %13 = vsyncpa [#allocation6], 0
    %14 = vsyncpa [#allocation4], 0
    %s15 = scalar_lea.sflag [#allocation4], 1
    %16 = vsyncpa %s15, 0
    loop: start=0, step=1, limit=5
    $region2: #{tpu_custom_call.1} parent=1 // loop_pre_header
      _
    $region3: #{tpu_custom_call.1} parent=1 // loop_header
      %s18 = sphi 0, %s22
      %p19 = scmp.ge.s32.totalorder %s18, 5
      %s28 = sphi 0, %s30
      %s31 = sphi 0, %s28
      %s32 = sphi 0, %s31
      %s48 = sphi 0, %s32
      %s52 = sphi 0, %s52
      %s54 = sphi 0, %s52
      %s55 = sphi 0, %s54
      %s69 = sphi 0, %s55
      %s73 = sphi 0, %s73
      %s75 = sphi 0, %s73
      %s76 = sphi 0, %s75
      %s90 = sphi 0, %s76
      %s94 = sphi 0, %s94
      %s96 = sphi 0, %s94
      %s97 = sphi 0, %s96
      %s111 = sphi 0, %s97
      %s115 = sphi 0, %s115
      %s117 = sphi 0, %s115
      %s118 = sphi 0, %s117
      %s132 = sphi 0, %s118
      %s136 = sphi 0, %s136
      %s138 = sphi 0, %s136
      %s139 = sphi 0, %s138
      %s153 = sphi 0, %s139
      %s157 = sphi 0, %s157
      %s159 = sphi 0, %s157
      %s160 = sphi 0, %s159
      %s174 = sphi 0, %s160
      %s180 = sphi 0, %s182
      %s183 = sphi 0, %s180
      %s184 = sphi 0, %s183
      %s200 = sphi 0, %s184
    $region4: #{tpu_custom_call.1} parent=1 // loop_header_branch
      %21 = sbr.rel (%p19) target = $region8
    $region5: #{tpu_custom_call.1} parent=1 // loop_body
      %s23 = ssub.s32 %s18, 1
      %s24 = ssub.s32 %s18, 2
      %s25 = sadd.s32 %s18, 1
      %s26 = ssub.s32 %s18, %s25
      %p27 = scmp.eq.s32.totalorder %s26, 0
      %s29 = sadd.s32 %s28, 1
      %s30 = scalar_select %p27, %s28, %s29
      %p33 = pneg %p27
      %p34 = scmp.eq.s32.totalorder %s18, 2
      %p35 = por %p33, %p34
      %p36 = scmp.ne.s32.totalorder %s28, %s31
      %p37 = scmp.eq.s32.totalorder %s18, 0
      %p38 = por %p36, %p37
      %p39 = scmp.ne.s32.totalorder %s28, %s31
      %p40 = scmp.eq.s32.totalorder %s23, 2
      %p41 = por %p39, %p40
      %p42 = scmp.ne.s32.totalorder %s31, %s32
      %p43 = scmp.eq.s32.totalorder %s23, 0
      %p44 = por %p42, %p43
      %p45 = scmp.ne.s32.totalorder %s31, %s32
      %p46 = scmp.eq.s32.totalorder %s24, 2
      %p47 = por %p45, %p46
      %p49 = scmp.ne.s32.totalorder %s32, %s48
      %p50 = scmp.eq.s32.totalorder %s24, 0
      %p51 = por %p49, %p50
      %s53 = sadd.s32 %s52, 1
      %p56 = scmp.eq.s32.totalorder %s18, 2
      %p57 = scmp.ne.s32.totalorder %s52, %s54
      %p58 = scmp.eq.s32.totalorder %s18, 0
      %p59 = por %p57, %p58
      %p60 = scmp.ne.s32.totalorder %s52, %s54
      %p61 = scmp.eq.s32.totalorder %s23, 2
      %p62 = por %p60, %p61
      %p63 = scmp.ne.s32.totalorder %s54, %s55
      %p64 = scmp.eq.s32.totalorder %s23, 0
      %p65 = por %p63, %p64
      %p66 = scmp.ne.s32.totalorder %s54, %s55
      %p67 = scmp.eq.s32.totalorder %s24, 2
      %p68 = por %p66, %p67
      %p70 = scmp.ne.s32.totalorder %s55, %s69
      %p71 = scmp.eq.s32.totalorder %s24, 0
      %p72 = por %p70, %p71
      %s74 = sadd.s32 %s73, 1
      %p77 = scmp.eq.s32.totalorder %s18, 2
      %p78 = scmp.ne.s32.totalorder %s73, %s75
      %p79 = scmp.eq.s32.totalorder %s18, 0
      %p80 = por %p78, %p79
      %p81 = scmp.ne.s32.totalorder %s73, %s75
      %p82 = scmp.eq.s32.totalorder %s23, 2
      %p83 = por %p81, %p82
      %p84 = scmp.ne.s32.totalorder %s75, %s76
      %p85 = scmp.eq.s32.totalorder %s23, 0
      %p86 = por %p84, %p85
      %p87 = scmp.ne.s32.totalorder %s75, %s76
      %p88 = scmp.eq.s32.totalorder %s24, 2
      %p89 = por %p87, %p88
      %p91 = scmp.ne.s32.totalorder %s76, %s90
      %p92 = scmp.eq.s32.totalorder %s24, 0
      %p93 = por %p91, %p92
      %s95 = sadd.s32 %s94, 1
      %p98 = scmp.eq.s32.totalorder %s18, 2
      %p99 = scmp.ne.s32.totalorder %s94, %s96
      %p100 = scmp.eq.s32.totalorder %s18, 0
      %p101 = por %p99, %p100
      %p102 = scmp.ne.s32.totalorder %s94, %s96
      %p103 = scmp.eq.s32.totalorder %s23, 2
      %p104 = por %p102, %p103
      %p105 = scmp.ne.s32.totalorder %s96, %s97
      %p106 = scmp.eq.s32.totalorder %s23, 0
      %p107 = por %p105, %p106
      %p108 = scmp.ne.s32.totalorder %s96, %s97
      %p109 = scmp.eq.s32.totalorder %s24, 2
      %p110 = por %p108, %p109
      %p112 = scmp.ne.s32.totalorder %s97, %s111
      %p113 = scmp.eq.s32.totalorder %s24, 0
      %p114 = por %p112, %p113
      %s116 = sadd.s32 %s115, 1
      %p119 = scmp.eq.s32.totalorder %s18, 2
      %p120 = scmp.ne.s32.totalorder %s115, %s117
      %p121 = scmp.eq.s32.totalorder %s18, 0
      %p122 = por %p120, %p121
      %p123 = scmp.ne.s32.totalorder %s115, %s117
      %p124 = scmp.eq.s32.totalorder %s23, 2
      %p125 = por %p123, %p124
      %p126 = scmp.ne.s32.totalorder %s117, %s118
      %p127 = scmp.eq.s32.totalorder %s23, 0
      %p128 = por %p126, %p127
      %p129 = scmp.ne.s32.totalorder %s117, %s118
      %p130 = scmp.eq.s32.totalorder %s24, 2
      %p131 = por %p129, %p130
      %p133 = scmp.ne.s32.totalorder %s118, %s132
      %p134 = scmp.eq.s32.totalorder %s24, 0
      %p135 = por %p133, %p134
      %s137 = sadd.s32 %s136, 1
      %p140 = scmp.eq.s32.totalorder %s18, 2
      %p141 = scmp.ne.s32.totalorder %s136, %s138
      %p142 = scmp.eq.s32.totalorder %s18, 0
      %p143 = por %p141, %p142
      %p144 = scmp.ne.s32.totalorder %s136, %s138
      %p145 = scmp.eq.s32.totalorder %s23, 2
      %p146 = por %p144, %p145
      %p147 = scmp.ne.s32.totalorder %s138, %s139
      %p148 = scmp.eq.s32.totalorder %s23, 0
      %p149 = por %p147, %p148
      %p150 = scmp.ne.s32.totalorder %s138, %s139
      %p151 = scmp.eq.s32.totalorder %s24, 2
      %p152 = por %p150, %p151
      %p154 = scmp.ne.s32.totalorder %s139, %s153
      %p155 = scmp.eq.s32.totalorder %s24, 0
      %p156 = por %p154, %p155
      %s158 = sadd.s32 %s157, 1
      %p161 = scmp.eq.s32.totalorder %s18, 2
      %p162 = scmp.ne.s32.totalorder %s157, %s159
      %p163 = scmp.eq.s32.totalorder %s18, 0
      %p164 = por %p162, %p163
      %p165 = scmp.ne.s32.totalorder %s157, %s159
      %p166 = scmp.eq.s32.totalorder %s23, 2
      %p167 = por %p165, %p166
      %p168 = scmp.ne.s32.totalorder %s159, %s160
      %p169 = scmp.eq.s32.totalorder %s23, 0
      %p170 = por %p168, %p169
      %p171 = scmp.ne.s32.totalorder %s159, %s160
      %p172 = scmp.eq.s32.totalorder %s24, 2
      %p173 = por %p171, %p172
      %p175 = scmp.ne.s32.totalorder %s160, %s174
      %p176 = scmp.eq.s32.totalorder %s24, 0
      %p177 = por %p175, %p176
      %s178 = ssub.s32 %s18, %s25
      %p179 = scmp.eq.s32.totalorder %s178, 0
      %s181 = sadd.s32 %s180, 1
      %s182 = scalar_select %p179, %s180, %s181
      %p185 = pneg %p179
      %p186 = scmp.eq.s32.totalorder %s18, 2
      %p187 = por %p185, %p186
      %p188 = scmp.ne.s32.totalorder %s180, %s183
      %p189 = scmp.eq.s32.totalorder %s18, 0
      %p190 = por %p188, %p189
      %p191 = scmp.ne.s32.totalorder %s180, %s183
      %p192 = scmp.eq.s32.totalorder %s23, 2
      %p193 = por %p191, %p192
      %p194 = scmp.ne.s32.totalorder %s183, %s184
      %p195 = scmp.eq.s32.totalorder %s23, 0
      %p196 = por %p194, %p195
      %p197 = scmp.ne.s32.totalorder %s183, %s184
      %p198 = scmp.eq.s32.totalorder %s24, 2
      %p199 = por %p197, %p198
      %p201 = scmp.ne.s32.totalorder %s184, %s200
      %p202 = scmp.eq.s32.totalorder %s24, 0
      %p203 = por %p201, %p202
      %p204 = scmp.le.s32.totalorder 1, %s18
      %p205 = scmp.lt.s32.totalorder %s18, 4
      %p206 = pnand %p204, %p205
      %p207 = pneg %p206
      // Predicated region
      $region9: #{tpu_custom_call.1} parent=5 // pred_check
        _
      $region10: #{tpu_custom_call.1} parent=5 // pred_check_branch
        %209 = sbr.rel (%p206) target = $region12
      $region11: #{tpu_custom_call.1} parent=5 // pred_region
        %s210 = ssub.s32 %s18, 1
        // Predicated region
        $region13: #{tpu_custom_call.1} parent=11 // pred_check
          %p211 = pneg %p65
        $region14: #{tpu_custom_call.1} parent=11 // pred_check_branch
          %213 = sbr.rel (%p211) target = $region16
        $region15: #{tpu_custom_call.1} parent=11 // pred_region
          _
        $region16: #{tpu_custom_call.1} parent=11 // pred_fallthru
          _
        // Predicated region
        $region17: #{tpu_custom_call.1} parent=11 // pred_check
          %p214 = pneg %p86
        $region18: #{tpu_custom_call.1} parent=11 // pred_check_branch
          %216 = sbr.rel (%p214) target = $region20
        $region19: #{tpu_custom_call.1} parent=11 // pred_region
          _
        $region20: #{tpu_custom_call.1} parent=11 // pred_fallthru
          _
        // Predicated region
        $region21: #{tpu_custom_call.1} parent=11 // pred_check
          %p217 = pneg %p107
        $region22: #{tpu_custom_call.1} parent=11 // pred_check_branch
          %219 = sbr.rel (%p217) target = $region24
        $region23: #{tpu_custom_call.1} parent=11 // pred_region
          %221 = vsyncadd [#allocation3], 0
          %s222 = sshll.u32 %s3, 4
          %s223 = int_to_ptr.hbm [resolvable:$true] %s222
          %s224 = sshll.u32 [#allocation2], 4
          %s225 = int_to_ptr.vmem [resolvable:$true] %s224
          %230 = dma.hbm_to_vmem [thread:$0]  %s223, 2048, %s225, [#allocation3], 128, 128, 8
        $region24: #{tpu_custom_call.1} parent=11 // pred_fallthru
          _
        // Predicated region
        $region25: #{tpu_custom_call.1} parent=11 // pred_check
          %p231 = pneg %p128
        $region26: #{tpu_custom_call.1} parent=11 // pred_check_branch
          %233 = sbr.rel (%p231) target = $region28
        $region27: #{tpu_custom_call.1} parent=11 // pred_region
          _
        $region28: #{tpu_custom_call.1} parent=11 // pred_fallthru
          _
        // Predicated region
        $region29: #{tpu_custom_call.1} parent=11 // pred_check
          %p234 = pneg %p149
        $region30: #{tpu_custom_call.1} parent=11 // pred_check_branch
          %236 = sbr.rel (%p234) target = $region32
        $region31: #{tpu_custom_call.1} parent=11 // pred_region
          %238 = vsyncadd [#allocation6], 0
          %s239 = sshll.u32 %s5, 4
          %s240 = int_to_ptr.hbm [resolvable:$true] %s239
          %s241 = sshll.u32 [#allocation5], 4
          %s242 = int_to_ptr.vmem [resolvable:$true] %s241
          %247 = dma.hbm_to_vmem [thread:$0]  %s240, 2048, %s242, [#allocation6], 128, 128, 8
        $region32: #{tpu_custom_call.1} parent=11 // pred_fallthru
          _
        // Predicated region
        $region33: #{tpu_custom_call.1} parent=11 // pred_check
          %p248 = pneg %p170
        $region34: #{tpu_custom_call.1} parent=11 // pred_check_branch
          %250 = sbr.rel (%p248) target = $region36
        $region35: #{tpu_custom_call.1} parent=11 // pred_region
          _
        $region36: #{tpu_custom_call.1} parent=11 // pred_fallthru
          _
      $region12: #{tpu_custom_call.1} parent=5 // pred_fallthru
        _
      %p251 = scmp.lt.s32.totalorder %s18, 3
      // Predicated region
      $region37: #{tpu_custom_call.1} parent=5 // pred_check
        %p252 = pneg %p251
      $region38: #{tpu_custom_call.1} parent=5 // pred_check_branch
        %254 = sbr.rel (%p252) target = $region40
      $region39: #{tpu_custom_call.1} parent=5 // pred_region
        // Predicated region
        $region41: #{tpu_custom_call.1} parent=39 // pred_check
          %p255 = pneg %p38
        $region42: #{tpu_custom_call.1} parent=39 // pred_check_branch
          %257 = sbr.rel (%p255) target = $region44
        $region43: #{tpu_custom_call.1} parent=39 // pred_region
          %s258 = smul.u32 4, %s18
          %p259 = scmp.lt.s32.totalorder %s258, 11
          %s260 = scalar_select %p259, %s258, 11
          %s261 = smul.addr %s260, 8
          %s262 = scalar_lea.vmem %s0, %s261
          %s263 = smul.u32 4, %s18
        $region44: #{tpu_custom_call.1} parent=39 // pred_fallthru
          _
      $region40: #{tpu_custom_call.1} parent=5 // pred_fallthru
        _
      %p264 = scmp.le.s32.totalorder 1, %s18
      %p265 = scmp.lt.s32.totalorder %s18, 4
      %p266 = pnand %p264, %p265
      %p267 = pneg %p266
      // Predicated region
      $region45: #{tpu_custom_call.1} parent=5 // pred_check
        _
      $region46: #{tpu_custom_call.1} parent=5 // pred_check_branch
        %269 = sbr.rel (%p266) target = $region48
      $region47: #{tpu_custom_call.1} parent=5 // pred_region
        %s270 = ssub.s32 %s18, 1
        // Predicated region
        $region49: #{tpu_custom_call.1} parent=47 // pred_check
          %p271 = pneg %p107
        $region50: #{tpu_custom_call.1} parent=47 // pred_check_branch
          %273 = sbr.rel (%p271) target = $region52
        $region51: #{tpu_custom_call.1} parent=47 // pred_region
          %275 = dma.done [#allocation3], 2048
        $region52: #{tpu_custom_call.1} parent=47 // pred_fallthru
          _
        // Predicated region
        $region53: #{tpu_custom_call.1} parent=47 // pred_check
          %p276 = pneg %p149
        $region54: #{tpu_custom_call.1} parent=47 // pred_check_branch
          %278 = sbr.rel (%p276) target = $region56
        $region55: #{tpu_custom_call.1} parent=47 // pred_region
          %280 = dma.done [#allocation6], 2048
        $region56: #{tpu_custom_call.1} parent=47 // pred_fallthru
          _
        %s281 = smul.u32 4, %s23
        %p282 = scmp.lt.s32.totalorder %s281, 11
        %s283 = scalar_select %p282, %s281, 11
        %s284 = smul.addr %s283, 8
        %s285 = scalar_lea.vmem %s0, %s284
        %p286 = pneg %p44
        %p287 = pneg %p41
        %p288 = pneg %p65
        %p289 = pneg %p62
        %p290 = pneg %p86
        %p291 = pneg %p83
        %p292 = pneg %p107
        %p293 = pneg %p104
        %p294 = pneg %p128
        %p295 = pneg %p125
        %p296 = pneg %p149
        %p297 = pneg %p146
        %p298 = pneg %p170
        %p299 = pneg %p167
        %p300 = pneg %p196
        %p301 = pneg %p193
        %s302 = sand.u32 %s183, 1
        %s303 = scalar_lea.sflag [#allocation4], %s302
        %s304 = sand.u32 %s183, 1
        %s305 = smul.addr %s304, 32
        %s306 = scalar_lea.vmem [#allocation7], %s305
        %s307 = smul.u32 4, %s23
        %p308 = scmp.lt.s32.totalorder %s307, 11
        %s309 = scalar_select %p308, %s307, 11
        %s310 = smul.addr %s309, 8
        %s311 = scalar_lea.vmem %s0, %s310
        %s312 = smul.u32 4, %s23
        %s313 = smul.u32 4, %s23
        %v314 = vld [vmem:[%s311] sm:$0xff]
        %v315 = vld [vmem:[%s311 + $0x8] sm:$0xff]
        %v316 = vld [vmem:[%s311 + $0x10] sm:$0xff]
        %v317 = vld [vmem:[%s311 + $0x18] sm:$0xff]
        %v318 = vld [vmem:[%s1] sm:$0x1]
        %320 = vset.pattern.permute.xlu0 0
        %321 = vperm.xlu0 %320, %v314
        %v322 = vpop.permute.xlu0 %321
        %325 = vset.pattern.permute.xlu0 0
        %326 = vperm.xlu0 %325, %v315
        %v327 = vpop.permute.xlu0 %326
        %330 = vset.pattern.permute.xlu0 0
        %331 = vperm.xlu0 %330, %v316
        %v332 = vpop.permute.xlu0 %331
        %335 = vset.pattern.permute.xlu0 0
        %336 = vperm.xlu0 %335, %v317
        %v337 = vpop.permute.xlu0 %336
        %v340 = vperm.slane %v318, 0
        %v342 = vmul.f32 %v322, %v340
        %v343 = vmul.f32 %v327, %v340
        %v344 = vmul.f32 %v332, %v340
        %v345 = vmul.f32 %v337, %v340
        %v346 = vld [vmem:[%s2] sm:$0x1]
        %v348 = vperm.slane %v346, 0
        %v350 = vadd.f32 %v342, %v348
        %v351 = vadd.f32 %v343, %v348
        %v352 = vadd.f32 %v344, %v348
        %v353 = vadd.f32 %v345, %v348
        %v354 = vmul.f32 %v350, 0.1
        %v355 = vmul.f32 %v351, 0.1
        %v356 = vmul.f32 %v352, 0.1
        %v357 = vmul.f32 %v353, 0.1
        %v358 = vmax.f32 %v350, %v354
        %v359 = vmax.f32 %v351, %v355
        %v360 = vmax.f32 %v352, %v356
        %v361 = vmax.f32 %v353, %v357
        %v362 = vld [vmem:[#allocation2] sm:$0xff]
        %v363 = vld [vmem:[#allocation2 + $0x8] sm:$0xff]
        %v364 = vld [vmem:[#allocation2 + $0x10] sm:$0xff]
        %v365 = vld [vmem:[#allocation2 + $0x18] sm:$0xff]
        %v366 = vld [vmem:[#allocation2 + $0x20] sm:$0xff]
        %v367 = vld [vmem:[#allocation2 + $0x28] sm:$0xff]
        %v368 = vld [vmem:[#allocation2 + $0x30] sm:$0xff]
        %v369 = vld [vmem:[#allocation2 + $0x38] sm:$0xff]
        %v370 = vld [vmem:[#allocation2 + $0x40] sm:$0xff]
        %v371 = vld [vmem:[#allocation2 + $0x48] sm:$0xff]
        %v372 = vld [vmem:[#allocation2 + $0x50] sm:$0xff]
        %v373 = vld [vmem:[#allocation2 + $0x58] sm:$0xff]
        %v374 = vld [vmem:[#allocation2 + $0x60] sm:$0xff]
        %v375 = vld [vmem:[#allocation2 + $0x68] sm:$0xff]
        %v376 = vld [vmem:[#allocation2 + $0x70] sm:$0xff]
        %v377 = vld [vmem:[#allocation2 + $0x78] sm:$0xff]
        %v378 = vld [vmem:[%s4] sm:$0x1]
        %v380 = vperm.slane %v378, 0
        %382 = vmatpush.msra.mxu0 %v377
        %383 = vmatpush.msra.mxu0 %v376
        %384 = vmatpush.msra.mxu0 %v375
        %385 = vmatpush.msra.mxu0 %v374
        %386 = vmatpush.msra.mxu0 %v373
        %387 = vmatpush.msra.mxu0 %v372
        %388 = vmatpush.msra.mxu0 %v371
        %389 = vmatpush.msra.mxu0 %v370
        %390 = vmatpush.msra.mxu0 %v369
        %391 = vmatpush.msra.mxu0 %v368
        %392 = vmatpush.msra.mxu0 %v367
        %393 = vmatpush.msra.mxu0 %v366
        %394 = vmatpush.msra.mxu0 %v365
        %395 = vmatpush.msra.mxu0 %v364
        %396 = vmatpush.msra.mxu0 %v363
        %397 = vmatpush.msra.mxu0 %v362
        %398 = vmatmul.f32.gmra.mxu0 %v358
        %v399 = vpop.f32.mrf.mxu0
        %v400 = vadd.f32 %v380, %v399
        %401 = vmatmul.f32.gmra.mxu0 %v359
        %v402 = vpop.f32.mrf.mxu0
        %v403 = vadd.f32 %v380, %v402
        %404 = vmatmul.f32.gmra.mxu0 %v360
        %v405 = vpop.f32.mrf.mxu0
        %v406 = vadd.f32 %v380, %v405
        %407 = vmatmul.f32.gmra.mxu0 %v361
        %v408 = vpop.f32.mrf.mxu0
        %v409 = vadd.f32 %v380, %v408
        %410 = vdwg.mxu0
        %411 = vmax.xlane.f32.xlu0 %v400
        %v412 = vpop.xlane.xlu0 %411
        %413 = vmax.xlane.f32.xlu0 %v403
        %v414 = vpop.xlane.xlu0 %413
        %415 = vmax.xlane.f32.xlu0 %v406
        %v416 = vpop.xlane.xlu0 %415
        %417 = vmax.xlane.f32.xlu0 %v409
        %v418 = vpop.xlane.xlu0 %417
        %v419 = vsub.f32 %v400, %v412
        %v420 = vsub.f32 %v403, %v414
        %v421 = vsub.f32 %v406, %v416
        %v422 = vsub.f32 %v409, %v418
        %v423 = vmul.f32 %v419, 1.442695
        %v424 = vpow.pop %v423
        %v425 = vmul.f32 %v420, 1.442695
        %v426 = vpow.pop %v425
        %v427 = vmul.f32 %v421, 1.442695
        %v428 = vpow.pop %v427
        %v429 = vmul.f32 %v422, 1.442695
        %v430 = vpow.pop %v429
        %431 = vadd.xlane.f32.xlu0 %v424
        %v432 = vpop.xlane.xlu0 %431
        %433 = vadd.xlane.f32.xlu0 %v426
        %v434 = vpop.xlane.xlu0 %433
        %435 = vadd.xlane.f32.xlu0 %v428
        %v436 = vpop.xlane.xlu0 %435
        %437 = vadd.xlane.f32.xlu0 %v430
        %v438 = vpop.xlane.xlu0 %437
        %v439 = vrcp.pop %v432
        %v440 = vmul.f32 %v432, %v439
        %v441 = vsub.f32 1.0, %v440
        %v442 = vmul.f32 %v439, %v441
        %v443 = vadd.f32 %v439, %v442
        %vm444 = vweird.f32 %v432
        %vm445 = vweird.f32 %v439
        %vm446 = vmor %vm444, %vm445
        %v447 = vsel %vm446, %v439, %v443
        %v448 = vand.u32 2147483647, %v432
        %vm449 = vcmp.eq.f32.partialorder %v448, 8.507059e+37
        %v450 = vand.u32 %v432, 2147483648
        %v451 = vor.u32 1.1754944e-38, %v450
        %v452 = vsel %vm449, %v451, %v447
        %v453 = vmul.f32 %v424, %v452
        %v454 = vrcp.pop %v434
        %v455 = vmul.f32 %v434, %v454
        %v456 = vsub.f32 1.0, %v455
        %v457 = vmul.f32 %v454, %v456
        %v458 = vadd.f32 %v454, %v457
        %vm459 = vweird.f32 %v434
        %vm460 = vweird.f32 %v454
        %vm461 = vmor %vm459, %vm460
        %v462 = vsel %vm461, %v454, %v458
        %v463 = vand.u32 2147483647, %v434
        %vm464 = vcmp.eq.f32.partialorder %v463, 8.507059e+37
        %v465 = vand.u32 %v434, 2147483648
        %v466 = vor.u32 1.1754944e-38, %v465
        %v467 = vsel %vm464, %v466, %v462
        %v468 = vmul.f32 %v426, %v467
        %v469 = vrcp.pop %v436
        %v470 = vmul.f32 %v436, %v469
        %v471 = vsub.f32 1.0, %v470
        %v472 = vmul.f32 %v469, %v471
        %v473 = vadd.f32 %v469, %v472
        %vm474 = vweird.f32 %v436
        %vm475 = vweird.f32 %v469
        %vm476 = vmor %vm474, %vm475
        %v477 = vsel %vm476, %v469, %v473
        %v478 = vand.u32 2147483647, %v436
        %vm479 = vcmp.eq.f32.partialorder %v478, 8.507059e+37
        %v480 = vand.u32 %v436, 2147483648
        %v481 = vor.u32 1.1754944e-38, %v480
        %v482 = vsel %vm479, %v481, %v477
        %v483 = vmul.f32 %v428, %v482
        %v484 = vrcp.pop %v438
        %v485 = vmul.f32 %v438, %v484
        %v486 = vsub.f32 1.0, %v485
        %v487 = vmul.f32 %v484, %v486
        %v488 = vadd.f32 %v484, %v487
        %vm489 = vweird.f32 %v438
        %vm490 = vweird.f32 %v484
        %vm491 = vmor %vm489, %vm490
        %v492 = vsel %vm491, %v484, %v488
        %v493 = vand.u32 2147483647, %v438
        %vm494 = vcmp.eq.f32.partialorder %v493, 8.507059e+37
        %v495 = vand.u32 %v438, 2147483648
        %v496 = vor.u32 1.1754944e-38, %v495
        %v497 = vsel %vm494, %v496, %v492
        %v498 = vmul.f32 %v430, %v497
        %v499 = vld [vmem:[#allocation5] sm:$0xff]
        %v500 = vld [vmem:[#allocation5 + $0x8] sm:$0xff]
        %v501 = vld [vmem:[#allocation5 + $0x10] sm:$0xff]
        %v502 = vld [vmem:[#allocation5 + $0x18] sm:$0xff]
        %v503 = vld [vmem:[#allocation5 + $0x20] sm:$0xff]
        %v504 = vld [vmem:[#allocation5 + $0x28] sm:$0xff]
        %v505 = vld [vmem:[#allocation5 + $0x30] sm:$0xff]
        %v506 = vld [vmem:[#allocation5 + $0x38] sm:$0xff]
        %v507 = vld [vmem:[#allocation5 + $0x40] sm:$0xff]
        %v508 = vld [vmem:[#allocation5 + $0x48] sm:$0xff]
        %v509 = vld [vmem:[#allocation5 + $0x50] sm:$0xff]
        %v510 = vld [vmem:[#allocation5 + $0x58] sm:$0xff]
        %v511 = vld [vmem:[#allocation5 + $0x60] sm:$0xff]
        %v512 = vld [vmem:[#allocation5 + $0x68] sm:$0xff]
        %v513 = vld [vmem:[#allocation5 + $0x70] sm:$0xff]
        %v514 = vld [vmem:[#allocation5 + $0x78] sm:$0xff]
        %515 = vmatpush.msra.mxu0 %v514
        %516 = vmatpush.msra.mxu0 %v513
        %517 = vmatpush.msra.mxu0 %v512
        %518 = vmatpush.msra.mxu0 %v511
        %519 = vmatpush.msra.mxu0 %v510
        %520 = vmatpush.msra.mxu0 %v509
        %521 = vmatpush.msra.mxu0 %v508
        %522 = vmatpush.msra.mxu0 %v507
        %523 = vmatpush.msra.mxu0 %v506
        %524 = vmatpush.msra.mxu0 %v505
        %525 = vmatpush.msra.mxu0 %v504
        %526 = vmatpush.msra.mxu0 %v503
        %527 = vmatpush.msra.mxu0 %v502
        %528 = vmatpush.msra.mxu0 %v501
        %529 = vmatpush.msra.mxu0 %v500
        %530 = vmatpush.msra.mxu0 %v499
        %531 = vmatmul.f32.gmra.mxu0 %v453
        %v532 = vpop.f32.mrf.mxu0
        %v533 = vadd.f32 0.0, %v532
        %534 = vmatmul.f32.gmra.mxu0 %v468
        %v535 = vpop.f32.mrf.mxu0
        %v536 = vadd.f32 0.0, %v535
        %537 = vmatmul.f32.gmra.mxu0 %v483
        %v538 = vpop.f32.mrf.mxu0
        %v539 = vadd.f32 0.0, %v538
        %540 = vmatmul.f32.gmra.mxu0 %v498
        %v541 = vpop.f32.mrf.mxu0
        %v542 = vadd.f32 0.0, %v541
        %543 = vdwg.mxu0
        %vm544 = vcmp.gt.f32.partialorder %v314, 0.5
        %vm545 = vcmp.gt.f32.partialorder %v315, 0.5
        %vm546 = vcmp.gt.f32.partialorder %v316, 0.5
        %vm547 = vcmp.gt.f32.partialorder %v317, 0.5
        %v548 = vld [vmem:[%s6] sm:$0x1]
        %v549 = vsel %vm544, 1, 0
        %v550 = vsel %vm545, 1, 0
        %v551 = vsel %vm546, 1, 0
        %v552 = vsel %vm547, 1, 0
        %553 = vset.pattern.permute.xlu0 1
        %554 = vperm.xlu0 %553, %v549
        %v555 = vpop.permute.xlu0 %554
        %556 = vset.pattern.permute.xlu0 1
        %557 = vperm.xlu0 %556, %v550
        %v558 = vpop.permute.xlu0 %557
        %559 = vset.pattern.permute.xlu0 1
        %560 = vperm.xlu0 %559, %v551
        %v561 = vpop.permute.xlu0 %560
        %562 = vset.pattern.permute.xlu0 1
        %563 = vperm.xlu0 %562, %v552
        %v564 = vpop.permute.xlu0 %563
        %vm565 = vcmp.eq.s32.totalorder %v555, 1
        %vm566 = vcmp.eq.s32.totalorder %v558, 1
        %vm567 = vcmp.eq.s32.totalorder %v561, 1
        %vm568 = vcmp.eq.s32.totalorder %v564, 1
        %v569 = vperm.slane %v548, 0
        %v570 = vsel %vm565, %v569, %v533
        %v571 = vsel %vm566, %v569, %v536
        %v572 = vsel %vm567, %v569, %v539
        %v573 = vsel %vm568, %v569, %v542
        %vm574 = vcmp.gt.f32.partialorder %v314, 1.5
        %vm575 = vcmp.gt.f32.partialorder %v315, 1.5
        %vm576 = vcmp.gt.f32.partialorder %v316, 1.5
        %vm577 = vcmp.gt.f32.partialorder %v317, 1.5
        %v578 = vld [vmem:[%s6 + $0x1] sm:$0x1]
        %v579 = vsel %vm574, 1, 0
        %v580 = vsel %vm575, 1, 0
        %v581 = vsel %vm576, 1, 0
        %v582 = vsel %vm577, 1, 0
        %583 = vset.pattern.permute.xlu0 1
        %584 = vperm.xlu0 %583, %v579
        %v585 = vpop.permute.xlu0 %584
        %586 = vset.pattern.permute.xlu0 1
        %587 = vperm.xlu0 %586, %v580
        %v588 = vpop.permute.xlu0 %587
        %589 = vset.pattern.permute.xlu0 1
        %590 = vperm.xlu0 %589, %v581
        %v591 = vpop.permute.xlu0 %590
        %592 = vset.pattern.permute.xlu0 1
        %593 = vperm.xlu0 %592, %v582
        %v594 = vpop.permute.xlu0 %593
        %vm595 = vcmp.eq.s32.totalorder %v585, 1
        %vm596 = vcmp.eq.s32.totalorder %v588, 1
        %vm597 = vcmp.eq.s32.totalorder %v591, 1
        %vm598 = vcmp.eq.s32.totalorder %v594, 1
        %v599 = vperm.slane %v578, 0
        %v600 = vsel %vm595, %v599, %v570
        %v601 = vsel %vm596, %v599, %v571
        %v602 = vsel %vm597, %v599, %v572
        %v603 = vsel %vm598, %v599, %v573
        %604 = vst [vmem:[%s306] sm:$0xff] %v600
        %605 = vst [vmem:[%s306 + $0x8] sm:$0xff] %v601
        %606 = vst [vmem:[%s306 + $0x10] sm:$0xff] %v602
        %607 = vst [vmem:[%s306 + $0x18] sm:$0xff] %v603
        %s608 = sand.u32 %s183, 1
        %s609 = scalar_lea.sflag [#allocation4], %s608
        %s610 = sand.u32 %s183, 1
        %s611 = smul.addr %s610, 32
        %s612 = scalar_lea.vmem [#allocation7], %s611
        // Predicated region
        $region57: #{tpu_custom_call.1} parent=47 // pred_check
          %p613 = pneg %p193
        $region58: #{tpu_custom_call.1} parent=47 // pred_check_branch
          %615 = sbr.rel (%p613) target = $region60
        $region59: #{tpu_custom_call.1} parent=47 // pred_region
          %s616 = smul.u32 4, %s23
          %618 = vsyncadd %s609, 0
          %s619 = smul.addr %s616, 8
          %s620 = scalar_lea.hbm %s7, %s619
          %s621 = sshll.u32 %s612, 4
          %s622 = int_to_ptr.vmem [resolvable:$true] %s621
          %s623 = sshll.u32 %s620, 4
          %s624 = int_to_ptr.hbm [resolvable:$true] %s623
          %629 = dma.vmem_to_hbm [thread:$0]  %s622, 512, %s624, %s609, 128, 128, 8
        $region60: #{tpu_custom_call.1} parent=47 // pred_fallthru
          _
      $region48: #{tpu_custom_call.1} parent=5 // pred_fallthru
        _
      %p630 = scmp.le.s32.totalorder 2, %s18
      // Predicated region
      $region61: #{tpu_custom_call.1} parent=5 // pred_check
        %p631 = pneg %p630
      $region62: #{tpu_custom_call.1} parent=5 // pred_check_branch
        %633 = sbr.rel (%p631) target = $region64
      $region63: #{tpu_custom_call.1} parent=5 // pred_region
        %s634 = ssub.s32 %s18, 2
        // Predicated region
        $region65: #{tpu_custom_call.1} parent=63 // pred_check
          %p635 = pneg %p199
        $region66: #{tpu_custom_call.1} parent=63 // pred_check_branch
          %637 = sbr.rel (%p635) target = $region68
        $region67: #{tpu_custom_call.1} parent=63 // pred_region
          %s638 = sand.u32 %s184, 1
          %s639 = scalar_lea.sflag [#allocation4], %s638
          %s640 = sand.u32 %s184, 1
          %s641 = smul.addr %s640, 32
          %s642 = scalar_lea.vmem [#allocation7], %s641
          %644 = dma.done %s639, 512
        $region68: #{tpu_custom_call.1} parent=63 // pred_fallthru
          _
      $region64: #{tpu_custom_call.1} parent=5 // pred_fallthru
        _
    $region6: #{tpu_custom_call.1} parent=1 // loop_footer
      %s22 = sadd.s32 1, %s18
    $region7: #{tpu_custom_call.1} parent=1 // loop_footer_branch
      %17 = sbr.rel target = $region3
    $region8: #{tpu_custom_call.1} parent=1 // loop_exit
      _
    %645 = vsyncpa [#allocation3], 1
    %s646 = scalar_lea.sflag [#allocation3], 1
    %647 = vsyncpa %s646, 1
    %648 = vsyncpa [#allocation6], 1
    %649 = vsyncpa [#allocation4], 1
    %s650 = scalar_lea.sflag [#allocation4], 1
    %651 = vsyncpa %s650, 1

</llo_original>
